<compile_context>
chip_gen: v7x
topology: tpu7x:2x2x1
jax: 0.10.0
libtpu: 0.0.40
codegen_flags: <defaults>
</compile_context>

<pallas_src>
import jax
import jax.numpy as jnp
from jax.experimental import pallas as pl
from jax.experimental.pallas import tpu as pltpu

# ---------------- config (small, consistent with the module) ----------------
B = 2           # batch
T = 8           # tokens
D = 32          # emb_dim
FF = 4 * D      # feed-forward hidden (4 * emb_dim)

_GELU_C = 0.7978845608028654  # sqrt(2 / pi)


def _gelu_tanh(v):
    # 0.5 * x * (1 + tanh(sqrt(2/pi) * (x + 0.044715 * x^3)))
    return 0.5 * v * (1.0 + jnp.tanh(_GELU_C * (v + 0.044715 * v * v * v)))


# ---------------------------- Pallas kernel ---------------------------------
def ffn_kernel(x_ref, w1_ref, b1_ref, w2_ref, b2_ref, o_ref):
    x = x_ref[...]                                                     # (N, D)
    # Linear 1: (N, D) @ (D, FF) + (1, FF)   -- MXU, f32 accumulate.
    h = jnp.dot(x, w1_ref[...],
                preferred_element_type=jnp.float32,
                precision=jax.lax.Precision.HIGHEST) + b1_ref[...]
    # GELU (tanh approximation): polynomial on the VPU, tanh on the EUP slot.
    g = _gelu_tanh(h)                                                  # (N, FF)
    # Linear 2: (N, FF) @ (FF, D) + (1, D)   -- MXU, f32 accumulate.
    o_ref[...] = (jnp.dot(g, w2_ref[...],
                          preferred_element_type=jnp.float32,
                          precision=jax.lax.Precision.HIGHEST)
                  + b2_ref[...]).astype(o_ref.dtype)


# ------------------------------ wrapper --------------------------------------
def feed_forward(x, params):
    """x: (B, T, D) float32.  Weights in x @ W orientation (transpose of nn.Linear.weight)."""
    Bx, Tx, Dx = x.shape
    N = Bx * Tx
    x2 = x.reshape(N, Dx)                      # flatten batch*tokens -> one slab

    vmem = pltpu.MemorySpace.VMEM
    out = pl.pallas_call(
        ffn_kernel,
        out_shape=jax.ShapeDtypeStruct((N, Dx), x.dtype),
        # Whole-array VMEM residency: no grid, no pipeliner, single DMA per operand.
        in_specs=[
            pl.BlockSpec(memory_space=vmem),   # x       (N, D)
            pl.BlockSpec(memory_space=vmem),   # W1      (D, FF)
            pl.BlockSpec(memory_space=vmem),   # b1      (1, FF)
            pl.BlockSpec(memory_space=vmem),   # W2      (FF, D)
            pl.BlockSpec(memory_space=vmem),   # b2      (1, D)
        ],
        out_specs=pl.BlockSpec(memory_space=vmem),
    )(x2,
      params["w1"], params["b1"].reshape(1, FF),
      params["w2"], params["b2"].reshape(1, Dx))

    # TODO(synk): at real model sizes this FFN should be fused into the surrounding
    # transformer block (residual/LN/attention out-proj) instead of owning its own
    # pallas_call; standalone here because the spec is the FeedForward module alone.
    return out.reshape(Bx, Tx, Dx)


# --------------------- plain-JAX reference (for checking) --------------------
def reference(x, params):
    h = x @ params["w1"] + params["b1"]
    g = _gelu_tanh(h)
    return g @ params["w2"] + params["b2"]


# ------------------------------- main ----------------------------------------
if __name__ == "__main__":
    key = jax.random.PRNGKey(0)
    keys = jax.random.split(key, 5)

    def rnd(k, shape, scale=0.02):
        return (scale * jax.random.normal(k, shape)).astype(jnp.float32)

    params = {
        "w1": rnd(keys[0], (D, FF)),
        "b1": rnd(keys[1], (FF,)),
        "w2": rnd(keys[2], (FF, D)),
        "b2": rnd(keys[3], (D,)),
    }

    x = jax.random.normal(keys[4], (B, T, D), dtype=jnp.float32)

    out = jax.block_until_ready(feed_forward(x, params))

    ref = reference(x, params)
    if not jnp.allclose(out, ref, atol=2e-4, rtol=2e-4):
        raise AssertionError(
            f"mismatch vs reference, max abs err = {jnp.max(jnp.abs(out - ref))}")

    print("KERNEL_OK")
</pallas_src>

<mosaic_0001>
module attributes {stable_mosaic.version = 11 : i64} {
  func.func @ffn_kernel(%arg0: memref<16x32xf32, #tpu.memory_space<vmem>>, %arg1: memref<32x128xf32, #tpu.memory_space<vmem>>, %arg2: memref<1x128xf32, #tpu.memory_space<vmem>>, %arg3: memref<128x32xf32, #tpu.memory_space<vmem>>, %arg4: memref<1x32xf32, #tpu.memory_space<vmem>>, %arg5: memref<16x32xf32, #tpu.memory_space<vmem>>) attributes {dimension_semantics = [], scalar_prefetch = 0 : i64, scratch_operands = 0 : i64, tpu.core_type = #tpu.core_type<tc>} {
    %c0 = arith.constant 0 : index
    %c0_0 = arith.constant 0 : index
    %0 = vector.load %arg0[%c0, %c0_0] : memref<16x32xf32, #tpu.memory_space<vmem>>, vector<16x32xf32>
    %c0_1 = arith.constant 0 : index
    %c0_2 = arith.constant 0 : index
    %1 = vector.load %arg1[%c0_1, %c0_2] : memref<32x128xf32, #tpu.memory_space<vmem>>, vector<32x128xf32>
    %cst = arith.constant dense<0.000000e+00> : vector<16x128xf32>
    %2 = tpu.matmul %0, %1, %cst {dimension_numbers = #tpu.dot_dimension_numbers<[1], [0], [0], [1], [0, 0, 1, 1], [], []>, precision = #tpu.contract_precision<fp32>} : vector<16x32xf32>, vector<32x128xf32>, vector<16x128xf32> -> vector<16x128xf32>
    %c0_3 = arith.constant 0 : index
    %c0_4 = arith.constant 0 : index
    %3 = vector.load %arg2[%c0_3, %c0_4] : memref<1x128xf32, #tpu.memory_space<vmem>>, vector<1x128xf32>
    %4 = vector.broadcast %3 : vector<1x128xf32> to vector<16x128xf32>
    %5 = arith.addf %2, %4 : vector<16x128xf32>
    %cst_5 = arith.constant 5.000000e-01 : f32
    %6 = vector.broadcast %cst_5 : f32 to vector<16x128xf32>
    %7 = arith.mulf %6, %5 : vector<16x128xf32>
    %cst_6 = arith.constant 4.471500e-02 : f32
    %8 = vector.broadcast %cst_6 : f32 to vector<16x128xf32>
    %9 = arith.mulf %8, %5 : vector<16x128xf32>
    %10 = arith.mulf %9, %5 : vector<16x128xf32>
    %11 = arith.mulf %10, %5 : vector<16x128xf32>
    %12 = arith.addf %5, %11 : vector<16x128xf32>
    %cst_7 = arith.constant 0.797884583 : f32
    %13 = vector.broadcast %cst_7 : f32 to vector<16x128xf32>
    %14 = arith.mulf %13, %12 : vector<16x128xf32>
    %15 = math.tanh %14 : vector<16x128xf32>
    %cst_8 = arith.constant 1.000000e+00 : f32
    %16 = vector.broadcast %cst_8 : f32 to vector<16x128xf32>
    %17 = arith.addf %16, %15 : vector<16x128xf32>
    %18 = arith.mulf %7, %17 : vector<16x128xf32>
    %c0_9 = arith.constant 0 : index
    %c0_10 = arith.constant 0 : index
    %19 = vector.load %arg3[%c0_9, %c0_10] : memref<128x32xf32, #tpu.memory_space<vmem>>, vector<128x32xf32>
    %cst_11 = arith.constant dense<0.000000e+00> : vector<16x32xf32>
    %20 = tpu.matmul %18, %19, %cst_11 {dimension_numbers = #tpu.dot_dimension_numbers<[1], [0], [0], [1], [0, 0, 1, 1], [], []>, precision = #tpu.contract_precision<fp32>} : vector<16x128xf32>, vector<128x32xf32>, vector<16x32xf32> -> vector<16x32xf32>
    %c0_12 = arith.constant 0 : index
    %c0_13 = arith.constant 0 : index
    %21 = vector.load %arg4[%c0_12, %c0_13] : memref<1x32xf32, #tpu.memory_space<vmem>>, vector<1x32xf32>
    %22 = vector.broadcast %21 : vector<1x32xf32> to vector<16x32xf32>
    %23 = arith.addf %20, %22 : vector<16x32xf32>
    %c0_14 = arith.constant 0 : index
    %c0_15 = arith.constant 0 : index
    %24 = vector.load %arg5[%c0_14, %c0_15] : memref<16x32xf32, #tpu.memory_space<vmem>>, vector<16x32xf32>
    tpu.vector_store %arg5[%c0_14, %c0_15], %23 {strides = array<i32>} : memref<16x32xf32, #tpu.memory_space<vmem>>, vector<16x32xf32>,
    return
  }
}

</mosaic_0001>

<llo_original>
// kernel: tpu_custom_call.1
$region0: #{tpu_custom_call.1}
  #allocation0 [shape = 'u32[]', space=smem, size = 0x4, offset = 0x4, fixed_abs, tag = 'smem constant byte address 0x4 - core index']
  #allocation1 [shape = 'u32[144,128]{1,0:T(1,128)}', space=vmem, size = 0x12000, scoped, tag = 'internal scratch']
  %s0 = inlined_call_operand.vmem [shape: f32[16,32], index: 0, kind: input, shape index: {}]
  %s1 = inlined_call_operand.vmem [shape: f32[32,128], index: 1, kind: input, shape index: {}]
  %s2 = inlined_call_operand.vmem [shape: f32[1,128], index: 2, kind: input, shape index: {}]
  %s3 = inlined_call_operand.vmem [shape: f32[128,32], index: 3, kind: input, shape index: {}]
  %s4 = inlined_call_operand.vmem [shape: f32[1,32], index: 4, kind: input, shape index: {}]
  %s5 = inlined_call_operand.hbm [shape: f32[16,32], index: 5, kind: output, shape index: {}]
  %s6 = sld [smem:[#allocation0]]
  $region30: #{tpu_custom_call.1} parent=0
    _
  %s8 = ssub.s32 1, %s6
  %s9 = scalar_select 0, %s8, %s6
  $region1: #{tpu_custom_call.1} parent=0
    #allocation2 [shape = 'u8[8192]{0}', space=vmem, size = 0x2000, scoped, tag = 'output window, operand 0, single buffered']
    #allocation3 [shape = 's32[1]{0}', space=sflag, size = 0x4, scoped, tag = 'scoped memory for tpu_custom_call.1']
    %10 = vsyncpa [#allocation3], 0
    // Predicated region
    $region2: #{tpu_custom_call.1} parent=1 // pred_check
      _
    $region3: #{tpu_custom_call.1} parent=1 // pred_check_branch
      %12 = sbr.rel (0) target = $region5
    $region4: #{tpu_custom_call.1} parent=1 // pred_region
      _
    $region5: #{tpu_custom_call.1} parent=1 // pred_fallthru
      _
    // Predicated region
    $region6: #{tpu_custom_call.1} parent=1 // pred_check
      _
    $region7: #{tpu_custom_call.1} parent=1 // pred_check_branch
      %14 = sbr.rel (0) target = $region9
    $region8: #{tpu_custom_call.1} parent=1 // pred_region
      _
    $region9: #{tpu_custom_call.1} parent=1 // pred_fallthru
      _
    // Predicated region
    $region10: #{tpu_custom_call.1} parent=1 // pred_check
      _
    $region11: #{tpu_custom_call.1} parent=1 // pred_check_branch
      %16 = sbr.rel (0) target = $region13
    $region12: #{tpu_custom_call.1} parent=1 // pred_region
      _
    $region13: #{tpu_custom_call.1} parent=1 // pred_fallthru
      _
    // Predicated region
    $region14: #{tpu_custom_call.1} parent=1 // pred_check
      _
    $region15: #{tpu_custom_call.1} parent=1 // pred_check_branch
      %18 = sbr.rel (0) target = $region17
    $region16: #{tpu_custom_call.1} parent=1 // pred_region
      _
    $region17: #{tpu_custom_call.1} parent=1 // pred_fallthru
      _
    // Predicated region
    $region18: #{tpu_custom_call.1} parent=1 // pred_check
      _
    $region19: #{tpu_custom_call.1} parent=1 // pred_check_branch
      %20 = sbr.rel (0) target = $region21
    $region20: #{tpu_custom_call.1} parent=1 // pred_region
      _
    $region21: #{tpu_custom_call.1} parent=1 // pred_fallthru
      _
    %v21 = vld [vmem:[%s0] sm:$0xff]
    %v22 = vld [vmem:[%s0 + $0x8] sm:$0xff]
    %v23 = vld [vmem:[%s1] sm:$0xff]
    %v24 = vld [vmem:[%s1 + $0x8] sm:$0xff]
    %v25 = vld [vmem:[%s1 + $0x10] sm:$0xff]
    %v26 = vld [vmem:[%s1 + $0x18] sm:$0xff]
    %v27 = vld [vmem:[%s2] sm:$0x1]
    %v29 = vlaneseq
    %v30 = vshrl.u32 %v29, 7
    %v31 = vsub.s32 0, %v30
    %v32 = vrot.slane %v27, %v31
    %vm34 = vcmask 261120
    %v36 = vsel %vm34, %v21, 0
    %v39 = vsel %vm34, %v22, 0
    %41 = vmatprep.subr.mxu0 0.0
    %v42 = vand.u32 %v23, 4294901760
    %43 = vmatpush1.msra.mxu0 %v42
    %44 = vmatprep.subr.mxu0 0.0
    %v45 = vand.u32 %v24, 4294901760
    %46 = vmatpush1.msra.mxu0 %v45
    %47 = vmatprep.subr.mxu0 0.0
    %v48 = vand.u32 %v25, 4294901760
    %49 = vmatpush1.msra.mxu0 %v48
    %50 = vmatprep.subr.mxu0 0.0
    %v51 = vand.u32 %v26, 4294901760
    %52 = vmatpush1.msra.mxu0 %v51
    %53 = vmatprep.subr.mxu0 0.0
    %54 = vmatpush1.msra.mxu0 0.0
    %55 = vmatprep.subr.mxu0 0.0
    %56 = vmatpush1.msra.mxu0 0.0
    %57 = vmatprep.subr.mxu0 0.0
    %58 = vmatpush1.msra.mxu0 0.0
    %59 = vmatprep.subr.mxu0 0.0
    %60 = vmatpush1.msra.mxu0 0.0
    %61 = vmatprep.subr.mxu0 0.0
    %62 = vmatpush1.msra.mxu0 0.0
    %63 = vmatprep.subr.mxu0 0.0
    %64 = vmatpush1.msra.mxu0 0.0
    %65 = vmatprep.subr.mxu0 0.0
    %66 = vmatpush1.msra.mxu0 0.0
    %67 = vmatprep.subr.mxu0 0.0
    %68 = vmatpush1.msra.mxu0 0.0
    %69 = vmatprep.subr.mxu0 0.0
    %70 = vmatpush1.msra.mxu0 0.0
    %71 = vmatprep.subr.mxu0 0.0
    %72 = vmatpush1.msra.mxu0 0.0
    %73 = vmatprep.subr.mxu0 0.0
    %74 = vmatpush1.msra.mxu0 0.0
    %75 = vmatprep.subr.mxu0 0.0
    %76 = vmatpush1.msra.mxu0 0.0
    %77 = vmatprep.subr.mxu0 0.0
    %78 = vmatpush1.msra.mxu0 0.0
    %79 = vmatprep.subr.mxu0 0.0
    %80 = vmatpush1.msra.mxu0 0.0
    %81 = vmatprep.subr.mxu0 0.0
    %82 = vmatpush1.msra.mxu0 0.0
    %83 = vmatprep.subr.mxu0 0.0
    %84 = vmatpush1.msra.mxu0 0.0
    %85 = vmatprep.subr.mxu0 0.0
    %86 = vmatpush1.msra.mxu0 0.0
    %87 = vmatprep.subr.mxu0 0.0
    %88 = vmatpush1.msra.mxu0 0.0
    %89 = vmatprep.subr.mxu0 0.0
    %90 = vmatpush1.msra.mxu0 0.0
    %91 = vmatprep.subr.mxu0 0.0
    %92 = vmatpush1.msra.mxu0 0.0
    %93 = vmatprep.subr.mxu0 0.0
    %94 = vmatpush1.msra.mxu0 0.0
    %95 = vmatprep.subr.mxu0 0.0
    %96 = vmatpush1.msra.mxu0 0.0
    %97 = vmatprep.subr.mxu0 0.0
    %98 = vmatpush1.msra.mxu0 0.0
    %99 = vmatprep.subr.mxu0 0.0
    %100 = vmatpush1.msra.mxu0 0.0
    %101 = vmatprep.subr.mxu0 0.0
    %102 = vmatpush1.msra.mxu0 0.0
    %103 = vmatprep.subr.mxu0 0.0
    %104 = vmatpush1.msra.mxu0 0.0
    %105 = vmatprep.subr.mxu0 0.0
    %106 = vmatpush1.msra.mxu0 0.0
    %107 = vmatprep.subr.mxu0 0.0
    %108 = vmatpush1.msra.mxu0 0.0
    %109 = vmatprep.mubr.f32.mxu0 0.0
    %v110 = vand.u32 %v36, 4294901760
    %v111 = vsub.f32 %v36, %v110
    %v112 = vand.u32 %v111, 4294901760
    %v113 = vsub.f32 %v111, %v112
    %v114 = vand.u32 %v113, 4294901760
    %115 = vmatmul.mubr.f32.gmra.mrb[0].mxu0 %v114
    %v116 = vpop.f32.mrb[0].mxu0
    %v117 = vadd.f32 %v32, %v116
    %v118 = vpop.f32.mrb[0].mxu0
    %119 = vmatprep.mubr.f32.mxu0 0.0
    %v120 = vand.u32 %v39, 4294901760
    %v121 = vsub.f32 %v39, %v120
    %v122 = vand.u32 %v121, 4294901760
    %v123 = vsub.f32 %v121, %v122
    %v124 = vand.u32 %v123, 4294901760
    %125 = vmatmul.mubr.f32.gmra.mrb[0].mxu0 %v124
    %v126 = vpop.f32.mrb[0].mxu0
    %v127 = vadd.f32 %v32, %v126
    %v128 = vpop.f32.mrb[0].mxu0
    %129 = vdwg.mxu0
    %130 = vmatprep.subr.mxu0 0.0
    %v131 = vand.u32 %v23, 4294901760
    %v132 = vsub.f32 %v23, %v131
    %v133 = vand.u32 %v132, 4294901760
    %v134 = vsub.f32 %v132, %v133
    %v135 = vand.u32 %v134, 4294901760
    %136 = vmatpush1.msra.mxu0 %v135
    %137 = vmatprep.subr.mxu0 0.0
    %v138 = vand.u32 %v24, 4294901760
    %v139 = vsub.f32 %v24, %v138
    %v140 = vand.u32 %v139, 4294901760
    %v141 = vsub.f32 %v139, %v140
    %v142 = vand.u32 %v141, 4294901760
    %143 = vmatpush1.msra.mxu0 %v142
    %144 = vmatprep.subr.mxu0 0.0
    %v145 = vand.u32 %v25, 4294901760
    %v146 = vsub.f32 %v25, %v145
    %v147 = vand.u32 %v146, 4294901760
    %v148 = vsub.f32 %v146, %v147
    %v149 = vand.u32 %v148, 4294901760
    %150 = vmatpush1.msra.mxu0 %v149
    %151 = vmatprep.subr.mxu0 0.0
    %v152 = vand.u32 %v26, 4294901760
    %v153 = vsub.f32 %v26, %v152
    %v154 = vand.u32 %v153, 4294901760
    %v155 = vsub.f32 %v153, %v154
    %v156 = vand.u32 %v155, 4294901760
    %157 = vmatpush1.msra.mxu0 %v156
    %158 = vmatprep.subr.mxu0 0.0
    %159 = vmatpush1.msra.mxu0 0.0
    %160 = vmatprep.subr.mxu0 0.0
    %161 = vmatpush1.msra.mxu0 0.0
    %162 = vmatprep.subr.mxu0 0.0
    %163 = vmatpush1.msra.mxu0 0.0
    %164 = vmatprep.subr.mxu0 0.0
    %165 = vmatpush1.msra.mxu0 0.0
    %166 = vmatprep.subr.mxu0 0.0
    %167 = vmatpush1.msra.mxu0 0.0
    %168 = vmatprep.subr.mxu0 0.0
    %169 = vmatpush1.msra.mxu0 0.0
    %170 = vmatprep.subr.mxu0 0.0
    %171 = vmatpush1.msra.mxu0 0.0
    %172 = vmatprep.subr.mxu0 0.0
    %173 = vmatpush1.msra.mxu0 0.0
    %174 = vmatprep.subr.mxu0 0.0
    %175 = vmatpush1.msra.mxu0 0.0
    %176 = vmatprep.subr.mxu0 0.0
    %177 = vmatpush1.msra.mxu0 0.0
    %178 = vmatprep.subr.mxu0 0.0
    %179 = vmatpush1.msra.mxu0 0.0
    %180 = vmatprep.subr.mxu0 0.0
    %181 = vmatpush1.msra.mxu0 0.0
    %182 = vmatprep.subr.mxu0 0.0
    %183 = vmatpush1.msra.mxu0 0.0
    %184 = vmatprep.subr.mxu0 0.0
    %185 = vmatpush1.msra.mxu0 0.0
    %186 = vmatprep.subr.mxu0 0.0
    %187 = vmatpush1.msra.mxu0 0.0
    %188 = vmatprep.subr.mxu0 0.0
    %189 = vmatpush1.msra.mxu0 0.0
    %190 = vmatprep.subr.mxu0 0.0
    %191 = vmatpush1.msra.mxu0 0.0
    %192 = vmatprep.subr.mxu0 0.0
    %193 = vmatpush1.msra.mxu0 0.0
    %194 = vmatprep.subr.mxu0 0.0
    %195 = vmatpush1.msra.mxu0 0.0
    %196 = vmatprep.subr.mxu0 0.0
    %197 = vmatpush1.msra.mxu0 0.0
    %198 = vmatprep.subr.mxu0 0.0
    %199 = vmatpush1.msra.mxu0 0.0
    %200 = vmatprep.subr.mxu0 0.0
    %201 = vmatpush1.msra.mxu0 0.0
    %202 = vmatprep.subr.mxu0 0.0
    %203 = vmatpush1.msra.mxu0 0.0
    %204 = vmatprep.subr.mxu0 0.0
    %205 = vmatpush1.msra.mxu0 0.0
    %206 = vmatprep.subr.mxu0 0.0
    %207 = vmatpush1.msra.mxu0 0.0
    %208 = vmatprep.subr.mxu0 0.0
    %209 = vmatpush1.msra.mxu0 0.0
    %210 = vmatprep.subr.mxu0 0.0
    %211 = vmatpush1.msra.mxu0 0.0
    %212 = vmatprep.subr.mxu0 0.0
    %213 = vmatpush1.msra.mxu0 0.0
    %214 = vmatprep.mubr.f32.mxu0 0.0
    %v215 = vand.u32 %v36, 4294901760
    %216 = vmatmul.mubr.f32.gmra.mrb[0].mxu0 %v215
    %v217 = vpop.f32.mrb[0].mxu0
    %v218 = vadd.f32 %v117, %v217
    %v219 = vpop.f32.mrb[0].mxu0
    %220 = vmatprep.mubr.f32.mxu0 0.0
    %v221 = vand.u32 %v39, 4294901760
    %222 = vmatmul.mubr.f32.gmra.mrb[0].mxu0 %v221
    %v223 = vpop.f32.mrb[0].mxu0
    %v224 = vadd.f32 %v127, %v223
    %v225 = vpop.f32.mrb[0].mxu0
    %226 = vdwg.mxu0
    %227 = vmatprep.subr.mxu0 0.0
    %v228 = vand.u32 %v23, 4294901760
    %v229 = vsub.f32 %v23, %v228
    %230 = vmatpush1.msra.mxu0 %v229
    %231 = vmatprep.subr.mxu0 0.0
    %v232 = vand.u32 %v24, 4294901760
    %v233 = vsub.f32 %v24, %v232
    %234 = vmatpush1.msra.mxu0 %v233
    %235 = vmatprep.subr.mxu0 0.0
    %v236 = vand.u32 %v25, 4294901760
    %v237 = vsub.f32 %v25, %v236
    %238 = vmatpush1.msra.mxu0 %v237
    %239 = vmatprep.subr.mxu0 0.0
    %v240 = vand.u32 %v26, 4294901760
    %v241 = vsub.f32 %v26, %v240
    %242 = vmatpush1.msra.mxu0 %v241
    %243 = vmatprep.subr.mxu0 0.0
    %244 = vmatpush1.msra.mxu0 0.0
    %245 = vmatprep.subr.mxu0 0.0
    %246 = vmatpush1.msra.mxu0 0.0
    %247 = vmatprep.subr.mxu0 0.0
    %248 = vmatpush1.msra.mxu0 0.0
    %249 = vmatprep.subr.mxu0 0.0
    %250 = vmatpush1.msra.mxu0 0.0
    %251 = vmatprep.subr.mxu0 0.0
    %252 = vmatpush1.msra.mxu0 0.0
    %253 = vmatprep.subr.mxu0 0.0
    %254 = vmatpush1.msra.mxu0 0.0
    %255 = vmatprep.subr.mxu0 0.0
    %256 = vmatpush1.msra.mxu0 0.0
    %257 = vmatprep.subr.mxu0 0.0
    %258 = vmatpush1.msra.mxu0 0.0
    %259 = vmatprep.subr.mxu0 0.0
    %260 = vmatpush1.msra.mxu0 0.0
    %261 = vmatprep.subr.mxu0 0.0
    %262 = vmatpush1.msra.mxu0 0.0
    %263 = vmatprep.subr.mxu0 0.0
    %264 = vmatpush1.msra.mxu0 0.0
    %265 = vmatprep.subr.mxu0 0.0
    %266 = vmatpush1.msra.mxu0 0.0
    %267 = vmatprep.subr.mxu0 0.0
    %268 = vmatpush1.msra.mxu0 0.0
    %269 = vmatprep.subr.mxu0 0.0
    %270 = vmatpush1.msra.mxu0 0.0
    %271 = vmatprep.subr.mxu0 0.0
    %272 = vmatpush1.msra.mxu0 0.0
    %273 = vmatprep.subr.mxu0 0.0
    %274 = vmatpush1.msra.mxu0 0.0
    %275 = vmatprep.subr.mxu0 0.0
    %276 = vmatpush1.msra.mxu0 0.0
    %277 = vmatprep.subr.mxu0 0.0
    %278 = vmatpush1.msra.mxu0 0.0
    %279 = vmatprep.subr.mxu0 0.0
    %280 = vmatpush1.msra.mxu0 0.0
    %281 = vmatprep.subr.mxu0 0.0
    %282 = vmatpush1.msra.mxu0 0.0
    %283 = vmatprep.subr.mxu0 0.0
    %284 = vmatpush1.msra.mxu0 0.0
    %285 = vmatprep.subr.mxu0 0.0
    %286 = vmatpush1.msra.mxu0 0.0
    %287 = vmatprep.subr.mxu0 0.0
    %288 = vmatpush1.msra.mxu0 0.0
    %289 = vmatprep.subr.mxu0 0.0
    %290 = vmatpush1.msra.mxu0 0.0
    %291 = vmatprep.subr.mxu0 0.0
    %292 = vmatpush1.msra.mxu0 0.0
    %293 = vmatprep.subr.mxu0 0.0
    %294 = vmatpush1.msra.mxu0 0.0
    %295 = vmatprep.subr.mxu0 0.0
    %296 = vmatpush1.msra.mxu0 0.0
    %297 = vmatprep.subr.mxu0 0.0
    %298 = vmatpush1.msra.mxu0 0.0
    %299 = vmatprep.mubr.f32.mxu0 0.0
    %v300 = vand.u32 %v36, 4294901760
    %v301 = vsub.f32 %v36, %v300
    %302 = vmatmul.mubr.f32.gmra.mrb[0].mxu0 %v301
    %v303 = vpop.f32.mrb[0].mxu0
    %v304 = vadd.f32 %v218, %v303
    %v305 = vpop.f32.mrb[0].mxu0
    %306 = vmatprep.mubr.f32.mxu0 0.0
    %v307 = vand.u32 %v39, 4294901760
    %v308 = vsub.f32 %v39, %v307
    %309 = vmatmul.mubr.f32.gmra.mrb[0].mxu0 %v308
    %v310 = vpop.f32.mrb[0].mxu0
    %v311 = vadd.f32 %v224, %v310
    %v312 = vpop.f32.mrb[0].mxu0
    %313 = vdwg.mxu0
    %314 = vmatprep.subr.mxu0 0.0
    %v315 = vand.u32 %v23, 4294901760
    %316 = vmatpush1.msra.mxu0 %v315
    %317 = vmatprep.subr.mxu0 0.0
    %v318 = vand.u32 %v24, 4294901760
    %319 = vmatpush1.msra.mxu0 %v318
    %320 = vmatprep.subr.mxu0 0.0
    %v321 = vand.u32 %v25, 4294901760
    %322 = vmatpush1.msra.mxu0 %v321
    %323 = vmatprep.subr.mxu0 0.0
    %v324 = vand.u32 %v26, 4294901760
    %325 = vmatpush1.msra.mxu0 %v324
    %326 = vmatprep.subr.mxu0 0.0
    %327 = vmatpush1.msra.mxu0 0.0
    %328 = vmatprep.subr.mxu0 0.0
    %329 = vmatpush1.msra.mxu0 0.0
    %330 = vmatprep.subr.mxu0 0.0
    %331 = vmatpush1.msra.mxu0 0.0
    %332 = vmatprep.subr.mxu0 0.0
    %333 = vmatpush1.msra.mxu0 0.0
    %334 = vmatprep.subr.mxu0 0.0
    %335 = vmatpush1.msra.mxu0 0.0
    %336 = vmatprep.subr.mxu0 0.0
    %337 = vmatpush1.msra.mxu0 0.0
    %338 = vmatprep.subr.mxu0 0.0
    %339 = vmatpush1.msra.mxu0 0.0
    %340 = vmatprep.subr.mxu0 0.0
    %341 = vmatpush1.msra.mxu0 0.0
    %342 = vmatprep.subr.mxu0 0.0
    %343 = vmatpush1.msra.mxu0 0.0
    %344 = vmatprep.subr.mxu0 0.0
    %345 = vmatpush1.msra.mxu0 0.0
    %346 = vmatprep.subr.mxu0 0.0
    %347 = vmatpush1.msra.mxu0 0.0
    %348 = vmatprep.subr.mxu0 0.0
    %349 = vmatpush1.msra.mxu0 0.0
    %350 = vmatprep.subr.mxu0 0.0
    %351 = vmatpush1.msra.mxu0 0.0
    %352 = vmatprep.subr.mxu0 0.0
    %353 = vmatpush1.msra.mxu0 0.0
    %354 = vmatprep.subr.mxu0 0.0
    %355 = vmatpush1.msra.mxu0 0.0
    %356 = vmatprep.subr.mxu0 0.0
    %357 = vmatpush1.msra.mxu0 0.0
    %358 = vmatprep.subr.mxu0 0.0
    %359 = vmatpush1.msra.mxu0 0.0
    %360 = vmatprep.subr.mxu0 0.0
    %361 = vmatpush1.msra.mxu0 0.0
    %362 = vmatprep.subr.mxu0 0.0
    %363 = vmatpush1.msra.mxu0 0.0
    %364 = vmatprep.subr.mxu0 0.0
    %365 = vmatpush1.msra.mxu0 0.0
    %366 = vmatprep.subr.mxu0 0.0
    %367 = vmatpush1.msra.mxu0 0.0
    %368 = vmatprep.subr.mxu0 0.0
    %369 = vmatpush1.msra.mxu0 0.0
    %370 = vmatprep.subr.mxu0 0.0
    %371 = vmatpush1.msra.mxu0 0.0
    %372 = vmatprep.subr.mxu0 0.0
    %373 = vmatpush1.msra.mxu0 0.0
    %374 = vmatprep.subr.mxu0 0.0
    %375 = vmatpush1.msra.mxu0 0.0
    %376 = vmatprep.subr.mxu0 0.0
    %377 = vmatpush1.msra.mxu0 0.0
    %378 = vmatprep.subr.mxu0 0.0
    %379 = vmatpush1.msra.mxu0 0.0
    %380 = vmatprep.subr.mxu0 0.0
    %381 = vmatpush1.msra.mxu0 0.0
    %382 = vmatprep.mubr.f32.mxu0 0.0
    %v383 = vand.u32 %v36, 4294901760
    %v384 = vsub.f32 %v36, %v383
    %v385 = vand.u32 %v384, 4294901760
    %386 = vmatmul.mubr.f32.gmra.mrb[0].mxu0 %v385
    %v387 = vpop.f32.mrb[0].mxu0
    %v388 = vadd.f32 %v304, %v387
    %v389 = vpop.f32.mrb[0].mxu0
    %390 = vmatprep.mubr.f32.mxu0 0.0
    %v391 = vand.u32 %v39, 4294901760
    %v392 = vsub.f32 %v39, %v391
    %v393 = vand.u32 %v392, 4294901760
    %394 = vmatmul.mubr.f32.gmra.mrb[0].mxu0 %v393
    %v395 = vpop.f32.mrb[0].mxu0
    %v396 = vadd.f32 %v311, %v395
    %v397 = vpop.f32.mrb[0].mxu0
    %398 = vdwg.mxu0
    %399 = vmatprep.subr.mxu0 0.0
    %v400 = vand.u32 %v23, 4294901760
    %v401 = vsub.f32 %v23, %v400
    %v402 = vand.u32 %v401, 4294901760
    %403 = vmatpush1.msra.mxu0 %v402
    %404 = vmatprep.subr.mxu0 0.0
    %v405 = vand.u32 %v24, 4294901760
    %v406 = vsub.f32 %v24, %v405
    %v407 = vand.u32 %v406, 4294901760
    %408 = vmatpush1.msra.mxu0 %v407
    %409 = vmatprep.subr.mxu0 0.0
    %v410 = vand.u32 %v25, 4294901760
    %v411 = vsub.f32 %v25, %v410
    %v412 = vand.u32 %v411, 4294901760
    %413 = vmatpush1.msra.mxu0 %v412
    %414 = vmatprep.subr.mxu0 0.0
    %v415 = vand.u32 %v26, 4294901760
    %v416 = vsub.f32 %v26, %v415
    %v417 = vand.u32 %v416, 4294901760
    %418 = vmatpush1.msra.mxu0 %v417
    %419 = vmatprep.subr.mxu0 0.0
    %420 = vmatpush1.msra.mxu0 0.0
    %421 = vmatprep.subr.mxu0 0.0
    %422 = vmatpush1.msra.mxu0 0.0
    %423 = vmatprep.subr.mxu0 0.0
    %424 = vmatpush1.msra.mxu0 0.0
    %425 = vmatprep.subr.mxu0 0.0
    %426 = vmatpush1.msra.mxu0 0.0
    %427 = vmatprep.subr.mxu0 0.0
    %428 = vmatpush1.msra.mxu0 0.0
    %429 = vmatprep.subr.mxu0 0.0
    %430 = vmatpush1.msra.mxu0 0.0
    %431 = vmatprep.subr.mxu0 0.0
    %432 = vmatpush1.msra.mxu0 0.0
    %433 = vmatprep.subr.mxu0 0.0
    %434 = vmatpush1.msra.mxu0 0.0
    %435 = vmatprep.subr.mxu0 0.0
    %436 = vmatpush1.msra.mxu0 0.0
    %437 = vmatprep.subr.mxu0 0.0
    %438 = vmatpush1.msra.mxu0 0.0
    %439 = vmatprep.subr.mxu0 0.0
    %440 = vmatpush1.msra.mxu0 0.0
    %441 = vmatprep.subr.mxu0 0.0
    %442 = vmatpush1.msra.mxu0 0.0
    %443 = vmatprep.subr.mxu0 0.0
    %444 = vmatpush1.msra.mxu0 0.0
    %445 = vmatprep.subr.mxu0 0.0
    %446 = vmatpush1.msra.mxu0 0.0
    %447 = vmatprep.subr.mxu0 0.0
    %448 = vmatpush1.msra.mxu0 0.0
    %449 = vmatprep.subr.mxu0 0.0
    %450 = vmatpush1.msra.mxu0 0.0
    %451 = vmatprep.subr.mxu0 0.0
    %452 = vmatpush1.msra.mxu0 0.0
    %453 = vmatprep.subr.mxu0 0.0
    %454 = vmatpush1.msra.mxu0 0.0
    %455 = vmatprep.subr.mxu0 0.0
    %456 = vmatpush1.msra.mxu0 0.0
    %457 = vmatprep.subr.mxu0 0.0
    %458 = vmatpush1.msra.mxu0 0.0
    %459 = vmatprep.subr.mxu0 0.0
    %460 = vmatpush1.msra.mxu0 0.0
    %461 = vmatprep.subr.mxu0 0.0
    %462 = vmatpush1.msra.mxu0 0.0
    %463 = vmatprep.subr.mxu0 0.0
    %464 = vmatpush1.msra.mxu0 0.0
    %465 = vmatprep.subr.mxu0 0.0
    %466 = vmatpush1.msra.mxu0 0.0
    %467 = vmatprep.subr.mxu0 0.0
    %468 = vmatpush1.msra.mxu0 0.0
    %469 = vmatprep.subr.mxu0 0.0
    %470 = vmatpush1.msra.mxu0 0.0
    %471 = vmatprep.subr.mxu0 0.0
    %472 = vmatpush1.msra.mxu0 0.0
    %473 = vmatprep.subr.mxu0 0.0
    %474 = vmatpush1.msra.mxu0 0.0
    %475 = vmatprep.mubr.f32.mxu0 0.0
    %v476 = vand.u32 %v36, 4294901760
    %477 = vmatmul.mubr.f32.gmra.mrb[0].mxu0 %v476
    %v478 = vpop.f32.mrb[0].mxu0
    %v479 = vadd.f32 %v388, %v478
    %v480 = vpop.f32.mrb[0].mxu0
    %481 = vmatprep.mubr.f32.mxu0 0.0
    %v482 = vand.u32 %v39, 4294901760
    %483 = vmatmul.mubr.f32.gmra.mrb[0].mxu0 %v482
    %v484 = vpop.f32.mrb[0].mxu0
    %v485 = vadd.f32 %v396, %v484
    %v486 = vpop.f32.mrb[0].mxu0
    %487 = vdwg.mxu0
    %488 = vmatprep.subr.mxu0 0.0
    %v489 = vand.u32 %v23, 4294901760
    %490 = vmatpush1.msra.mxu0 %v489
    %491 = vmatprep.subr.mxu0 0.0
    %v492 = vand.u32 %v24, 4294901760
    %493 = vmatpush1.msra.mxu0 %v492
    %494 = vmatprep.subr.mxu0 0.0
    %v495 = vand.u32 %v25, 4294901760
    %496 = vmatpush1.msra.mxu0 %v495
    %497 = vmatprep.subr.mxu0 0.0
    %v498 = vand.u32 %v26, 4294901760
    %499 = vmatpush1.msra.mxu0 %v498
    %500 = vmatprep.subr.mxu0 0.0
    %501 = vmatpush1.msra.mxu0 0.0
    %502 = vmatprep.subr.mxu0 0.0
    %503 = vmatpush1.msra.mxu0 0.0
    %504 = vmatprep.subr.mxu0 0.0
    %505 = vmatpush1.msra.mxu0 0.0
    %506 = vmatprep.subr.mxu0 0.0
    %507 = vmatpush1.msra.mxu0 0.0
    %508 = vmatprep.subr.mxu0 0.0
    %509 = vmatpush1.msra.mxu0 0.0
    %510 = vmatprep.subr.mxu0 0.0
    %511 = vmatpush1.msra.mxu0 0.0
    %512 = vmatprep.subr.mxu0 0.0
    %513 = vmatpush1.msra.mxu0 0.0
    %514 = vmatprep.subr.mxu0 0.0
    %515 = vmatpush1.msra.mxu0 0.0
    %516 = vmatprep.subr.mxu0 0.0
    %517 = vmatpush1.msra.mxu0 0.0
    %518 = vmatprep.subr.mxu0 0.0
    %519 = vmatpush1.msra.mxu0 0.0
    %520 = vmatprep.subr.mxu0 0.0
    %521 = vmatpush1.msra.mxu0 0.0
    %522 = vmatprep.subr.mxu0 0.0
    %523 = vmatpush1.msra.mxu0 0.0
    %524 = vmatprep.subr.mxu0 0.0
    %525 = vmatpush1.msra.mxu0 0.0
    %526 = vmatprep.subr.mxu0 0.0
    %527 = vmatpush1.msra.mxu0 0.0
    %528 = vmatprep.subr.mxu0 0.0
    %529 = vmatpush1.msra.mxu0 0.0
    %530 = vmatprep.subr.mxu0 0.0
    %531 = vmatpush1.msra.mxu0 0.0
    %532 = vmatprep.subr.mxu0 0.0
    %533 = vmatpush1.msra.mxu0 0.0
    %534 = vmatprep.subr.mxu0 0.0
    %535 = vmatpush1.msra.mxu0 0.0
    %536 = vmatprep.subr.mxu0 0.0
    %537 = vmatpush1.msra.mxu0 0.0
    %538 = vmatprep.subr.mxu0 0.0
    %539 = vmatpush1.msra.mxu0 0.0
    %540 = vmatprep.subr.mxu0 0.0
    %541 = vmatpush1.msra.mxu0 0.0
    %542 = vmatprep.subr.mxu0 0.0
    %543 = vmatpush1.msra.mxu0 0.0
    %544 = vmatprep.subr.mxu0 0.0
    %545 = vmatpush1.msra.mxu0 0.0
    %546 = vmatprep.subr.mxu0 0.0
    %547 = vmatpush1.msra.mxu0 0.0
    %548 = vmatprep.subr.mxu0 0.0
    %549 = vmatpush1.msra.mxu0 0.0
    %550 = vmatprep.subr.mxu0 0.0
    %551 = vmatpush1.msra.mxu0 0.0
    %552 = vmatprep.subr.mxu0 0.0
    %553 = vmatpush1.msra.mxu0 0.0
    %554 = vmatprep.subr.mxu0 0.0
    %555 = vmatpush1.msra.mxu0 0.0
    %556 = vmatprep.mubr.f32.mxu0 0.0
    %v557 = vand.u32 %v36, 4294901760
    %558 = vmatmul.mubr.f32.gmra.mrb[0].mxu0 %v557
    %v559 = vpop.f32.mrb[0].mxu0
    %v560 = vadd.f32 %v479, %v559
    %v561 = vpop.f32.mrb[0].mxu0
    %562 = vmatprep.mubr.f32.mxu0 0.0
    %v563 = vand.u32 %v39, 4294901760
    %564 = vmatmul.mubr.f32.gmra.mrb[0].mxu0 %v563
    %v565 = vpop.f32.mrb[0].mxu0
    %v566 = vadd.f32 %v485, %v565
    %v567 = vpop.f32.mrb[0].mxu0
    %568 = vdwg.mxu0
    %v569 = vmul.f32 %v560, 0.5
    %v570 = vmul.f32 %v566, 0.5
    %v571 = vmul.f32 %v560, 0.044715
    %v572 = vmul.f32 %v566, 0.044715
    %v573 = vmul.f32 %v571, %v560
    %v574 = vmul.f32 %v572, %v566
    %v575 = vmul.f32 %v573, %v560
    %v576 = vmul.f32 %v574, %v566
    %v577 = vadd.f32 %v560, %v575
    %v578 = vadd.f32 %v566, %v576
    %v579 = vmul.f32 %v577, 0.7978846
    %v580 = vmul.f32 %v578, 0.7978846
    %v581 = vtanh.pop %v579
    %v582 = vtanh.pop %v580
    %v583 = vadd.f32 %v581, 1.0
    %v584 = vadd.f32 %v582, 1.0
    %v585 = vmul.f32 %v569, %v583
    %v586 = vmul.f32 %v570, %v584
    %v587 = vld [vmem:[%s3] sm:$0xff]
    %v588 = vld [vmem:[%s3 + $0x8] sm:$0xff]
    %v589 = vld [vmem:[%s3 + $0x10] sm:$0xff]
    %v590 = vld [vmem:[%s3 + $0x18] sm:$0xff]
    %v591 = vld [vmem:[%s3 + $0x20] sm:$0xff]
    %v592 = vld [vmem:[%s3 + $0x28] sm:$0xff]
    %v593 = vld [vmem:[%s3 + $0x30] sm:$0xff]
    %v594 = vld [vmem:[%s3 + $0x38] sm:$0xff]
    %v595 = vld [vmem:[%s3 + $0x40] sm:$0xff]
    %v596 = vld [vmem:[%s3 + $0x48] sm:$0xff]
    %v597 = vld [vmem:[%s3 + $0x50] sm:$0xff]
    %v598 = vld [vmem:[%s3 + $0x58] sm:$0xff]
    %v599 = vld [vmem:[%s3 + $0x60] sm:$0xff]
    %v600 = vld [vmem:[%s3 + $0x68] sm:$0xff]
    %v601 = vld [vmem:[%s3 + $0x70] sm:$0xff]
    %v602 = vld [vmem:[%s3 + $0x78] sm:$0xff]
    %v603 = vld [vmem:[%s4] sm:$0x1]
    %v605 = vlaneseq
    %v606 = vshrl.u32 %v605, 7
    %v607 = vsub.s32 0, %v606
    %v608 = vrot.slane %v603, %v607
    %610 = vmatprep.subr.mxu0 0.0
    %v611 = vand.u32 %v587, 4294901760
    %612 = vmatpush1.msra.mxu0 %v611
    %613 = vmatprep.subr.mxu0 0.0
    %v614 = vand.u32 %v588, 4294901760
    %615 = vmatpush1.msra.mxu0 %v614
    %616 = vmatprep.subr.mxu0 0.0
    %v617 = vand.u32 %v589, 4294901760
    %618 = vmatpush1.msra.mxu0 %v617
    %619 = vmatprep.subr.mxu0 0.0
    %v620 = vand.u32 %v590, 4294901760
    %621 = vmatpush1.msra.mxu0 %v620
    %622 = vmatprep.subr.mxu0 0.0
    %v623 = vand.u32 %v591, 4294901760
    %624 = vmatpush1.msra.mxu0 %v623
    %625 = vmatprep.subr.mxu0 0.0
    %v626 = vand.u32 %v592, 4294901760
    %627 = vmatpush1.msra.mxu0 %v626
    %628 = vmatprep.subr.mxu0 0.0
    %v629 = vand.u32 %v593, 4294901760
    %630 = vmatpush1.msra.mxu0 %v629
    %631 = vmatprep.subr.mxu0 0.0
    %v632 = vand.u32 %v594, 4294901760
    %633 = vmatpush1.msra.mxu0 %v632
    %634 = vmatprep.subr.mxu0 0.0
    %v635 = vand.u32 %v595, 4294901760
    %636 = vmatpush1.msra.mxu0 %v635
    %637 = vmatprep.subr.mxu0 0.0
    %v638 = vand.u32 %v596, 4294901760
    %639 = vmatpush1.msra.mxu0 %v638
    %640 = vmatprep.subr.mxu0 0.0
    %v641 = vand.u32 %v597, 4294901760
    %642 = vmatpush1.msra.mxu0 %v641
    %643 = vmatprep.subr.mxu0 0.0
    %v644 = vand.u32 %v598, 4294901760
    %645 = vmatpush1.msra.mxu0 %v644
    %646 = vmatprep.subr.mxu0 0.0
    %v647 = vand.u32 %v599, 4294901760
    %648 = vmatpush1.msra.mxu0 %v647
    %649 = vmatprep.subr.mxu0 0.0
    %v650 = vand.u32 %v600, 4294901760
    %651 = vmatpush1.msra.mxu0 %v650
    %652 = vmatprep.subr.mxu0 0.0
    %v653 = vand.u32 %v601, 4294901760
    %654 = vmatpush1.msra.mxu0 %v653
    %655 = vmatprep.subr.mxu0 0.0
    %v656 = vand.u32 %v602, 4294901760
    %657 = vmatpush1.msra.mxu0 %v656
    %658 = vmatprep.subr.mxu0 0.0
    %659 = vmatpush1.msra.mxu0 0.0
    %660 = vmatprep.subr.mxu0 0.0
    %661 = vmatpush1.msra.mxu0 0.0
    %662 = vmatprep.subr.mxu0 0.0
    %663 = vmatpush1.msra.mxu0 0.0
    %664 = vmatprep.subr.mxu0 0.0
    %665 = vmatpush1.msra.mxu0 0.0
    %666 = vmatprep.subr.mxu0 0.0
    %667 = vmatpush1.msra.mxu0 0.0
    %668 = vmatprep.subr.mxu0 0.0
    %669 = vmatpush1.msra.mxu0 0.0
    %670 = vmatprep.subr.mxu0 0.0
    %671 = vmatpush1.msra.mxu0 0.0
    %672 = vmatprep.subr.mxu0 0.0
    %673 = vmatpush1.msra.mxu0 0.0
    %674 = vmatprep.subr.mxu0 0.0
    %675 = vmatpush1.msra.mxu0 0.0
    %676 = vmatprep.subr.mxu0 0.0
    %677 = vmatpush1.msra.mxu0 0.0
    %678 = vmatprep.subr.mxu0 0.0
    %679 = vmatpush1.msra.mxu0 0.0
    %680 = vmatprep.subr.mxu0 0.0
    %681 = vmatpush1.msra.mxu0 0.0
    %682 = vmatprep.subr.mxu0 0.0
    %683 = vmatpush1.msra.mxu0 0.0
    %684 = vmatprep.subr.mxu0 0.0
    %685 = vmatpush1.msra.mxu0 0.0
    %686 = vmatprep.subr.mxu0 0.0
    %687 = vmatpush1.msra.mxu0 0.0
    %688 = vmatprep.subr.mxu0 0.0
    %689 = vmatpush1.msra.mxu0 0.0
    %690 = vmatprep.mubr.f32.mxu0 0.0
    %v691 = vand.u32 %v585, 4294901760
    %v692 = vsub.f32 %v585, %v691
    %v693 = vand.u32 %v692, 4294901760
    %v694 = vsub.f32 %v692, %v693
    %v695 = vand.u32 %v694, 4294901760
    %696 = vmatmul.mubr.f32.gmra.mrb[0].mxu0 %v695
    %v697 = vpop.f32.mrb[0].mxu0
    %v698 = vadd.f32 %v608, %v697
    %v699 = vpop.f32.mrb[0].mxu0
    %700 = vmatprep.mubr.f32.mxu0 0.0
    %v701 = vand.u32 %v586, 4294901760
    %v702 = vsub.f32 %v586, %v701
    %v703 = vand.u32 %v702, 4294901760
    %v704 = vsub.f32 %v702, %v703
    %v705 = vand.u32 %v704, 4294901760
    %706 = vmatmul.mubr.f32.gmra.mrb[0].mxu0 %v705
    %v707 = vpop.f32.mrb[0].mxu0
    %v708 = vadd.f32 %v608, %v707
    %v709 = vpop.f32.mrb[0].mxu0
    %710 = vdwg.mxu0
    %711 = vmatprep.subr.mxu0 0.0
    %v712 = vand.u32 %v587, 4294901760
    %v713 = vsub.f32 %v587, %v712
    %v714 = vand.u32 %v713, 4294901760
    %v715 = vsub.f32 %v713, %v714
    %v716 = vand.u32 %v715, 4294901760
    %717 = vmatpush1.msra.mxu0 %v716
    %718 = vmatprep.subr.mxu0 0.0
    %v719 = vand.u32 %v588, 4294901760
    %v720 = vsub.f32 %v588, %v719
    %v721 = vand.u32 %v720, 4294901760
    %v722 = vsub.f32 %v720, %v721
    %v723 = vand.u32 %v722, 4294901760
    %724 = vmatpush1.msra.mxu0 %v723
    %725 = vmatprep.subr.mxu0 0.0
    %v726 = vand.u32 %v589, 4294901760
    %v727 = vsub.f32 %v589, %v726
    %v728 = vand.u32 %v727, 4294901760
    %v729 = vsub.f32 %v727, %v728
    %v730 = vand.u32 %v729, 4294901760
    %731 = vmatpush1.msra.mxu0 %v730
    %732 = vmatprep.subr.mxu0 0.0
    %v733 = vand.u32 %v590, 4294901760
    %v734 = vsub.f32 %v590, %v733
    %v735 = vand.u32 %v734, 4294901760
    %v736 = vsub.f32 %v734, %v735
    %v737 = vand.u32 %v736, 4294901760
    %738 = vmatpush1.msra.mxu0 %v737
    %739 = vmatprep.subr.mxu0 0.0
    %v740 = vand.u32 %v591, 4294901760
    %v741 = vsub.f32 %v591, %v740
    %v742 = vand.u32 %v741, 4294901760
    %v743 = vsub.f32 %v741, %v742
    %v744 = vand.u32 %v743, 4294901760
    %745 = vmatpush1.msra.mxu0 %v744
    %746 = vmatprep.subr.mxu0 0.0
    %v747 = vand.u32 %v592, 4294901760
    %v748 = vsub.f32 %v592, %v747
    %v749 = vand.u32 %v748, 4294901760
    %v750 = vsub.f32 %v748, %v749
    %v751 = vand.u32 %v750, 4294901760
    %752 = vmatpush1.msra.mxu0 %v751
    %753 = vmatprep.subr.mxu0 0.0
    %v754 = vand.u32 %v593, 4294901760
    %v755 = vsub.f32 %v593, %v754
    %v756 = vand.u32 %v755, 4294901760
    %v757 = vsub.f32 %v755, %v756
    %v758 = vand.u32 %v757, 4294901760
    %759 = vmatpush1.msra.mxu0 %v758
    %760 = vmatprep.subr.mxu0 0.0
    %v761 = vand.u32 %v594, 4294901760
    %v762 = vsub.f32 %v594, %v761
    %v763 = vand.u32 %v762, 4294901760
    %v764 = vsub.f32 %v762, %v763
    %v765 = vand.u32 %v764, 4294901760
    %766 = vmatpush1.msra.mxu0 %v765
    %767 = vmatprep.subr.mxu0 0.0
    %v768 = vand.u32 %v595, 4294901760
    %v769 = vsub.f32 %v595, %v768
    %v770 = vand.u32 %v769, 4294901760
    %v771 = vsub.f32 %v769, %v770
    %v772 = vand.u32 %v771, 4294901760
    %773 = vmatpush1.msra.mxu0 %v772
    %774 = vmatprep.subr.mxu0 0.0
    %v775 = vand.u32 %v596, 4294901760
    %v776 = vsub.f32 %v596, %v775
    %v777 = vand.u32 %v776, 4294901760
    %v778 = vsub.f32 %v776, %v777
    %v779 = vand.u32 %v778, 4294901760
    %780 = vmatpush1.msra.mxu0 %v779
    %781 = vmatprep.subr.mxu0 0.0
    %v782 = vand.u32 %v597, 4294901760
    %v783 = vsub.f32 %v597, %v782
    %v784 = vand.u32 %v783, 4294901760
    %v785 = vsub.f32 %v783, %v784
    %v786 = vand.u32 %v785, 4294901760
    %787 = vmatpush1.msra.mxu0 %v786
    %788 = vmatprep.subr.mxu0 0.0
    %v789 = vand.u32 %v598, 4294901760
    %v790 = vsub.f32 %v598, %v789
    %v791 = vand.u32 %v790, 4294901760
    %v792 = vsub.f32 %v790, %v791
    %v793 = vand.u32 %v792, 4294901760
    %794 = vmatpush1.msra.mxu0 %v793
    %795 = vmatprep.subr.mxu0 0.0
    %v796 = vand.u32 %v599, 4294901760
    %v797 = vsub.f32 %v599, %v796
    %v798 = vand.u32 %v797, 4294901760
    %v799 = vsub.f32 %v797, %v798
    %v800 = vand.u32 %v799, 4294901760
    %801 = vmatpush1.msra.mxu0 %v800
    %802 = vmatprep.subr.mxu0 0.0
    %v803 = vand.u32 %v600, 4294901760
    %v804 = vsub.f32 %v600, %v803
    %v805 = vand.u32 %v804, 4294901760
    %v806 = vsub.f32 %v804, %v805
    %v807 = vand.u32 %v806, 4294901760
    %808 = vmatpush1.msra.mxu0 %v807
    %809 = vmatprep.subr.mxu0 0.0
    %v810 = vand.u32 %v601, 4294901760
    %v811 = vsub.f32 %v601, %v810
    %v812 = vand.u32 %v811, 4294901760
    %v813 = vsub.f32 %v811, %v812
    %v814 = vand.u32 %v813, 4294901760
    %815 = vmatpush1.msra.mxu0 %v814
    %816 = vmatprep.subr.mxu0 0.0
    %v817 = vand.u32 %v602, 4294901760
    %v818 = vsub.f32 %v602, %v817
    %v819 = vand.u32 %v818, 4294901760
    %v820 = vsub.f32 %v818, %v819
    %v821 = vand.u32 %v820, 4294901760
    %822 = vmatpush1.msra.mxu0 %v821
    %823 = vmatprep.subr.mxu0 0.0
    %824 = vmatpush1.msra.mxu0 0.0
    %825 = vmatprep.subr.mxu0 0.0
    %826 = vmatpush1.msra.mxu0 0.0
    %827 = vmatprep.subr.mxu0 0.0
    %828 = vmatpush1.msra.mxu0 0.0
    %829 = vmatprep.subr.mxu0 0.0
    %830 = vmatpush1.msra.mxu0 0.0
    %831 = vmatprep.subr.mxu0 0.0
    %832 = vmatpush1.msra.mxu0 0.0
    %833 = vmatprep.subr.mxu0 0.0
    %834 = vmatpush1.msra.mxu0 0.0
    %835 = vmatprep.subr.mxu0 0.0
    %836 = vmatpush1.msra.mxu0 0.0
    %837 = vmatprep.subr.mxu0 0.0
    %838 = vmatpush1.msra.mxu0 0.0
    %839 = vmatprep.subr.mxu0 0.0
    %840 = vmatpush1.msra.mxu0 0.0
    %841 = vmatprep.subr.mxu0 0.0
    %842 = vmatpush1.msra.mxu0 0.0
    %843 = vmatprep.subr.mxu0 0.0
    %844 = vmatpush1.msra.mxu0 0.0
    %845 = vmatprep.subr.mxu0 0.0
    %846 = vmatpush1.msra.mxu0 0.0
    %847 = vmatprep.subr.mxu0 0.0
    %848 = vmatpush1.msra.mxu0 0.0
    %849 = vmatprep.subr.mxu0 0.0
    %850 = vmatpush1.msra.mxu0 0.0
    %851 = vmatprep.subr.mxu0 0.0
    %852 = vmatpush1.msra.mxu0 0.0
    %853 = vmatprep.subr.mxu0 0.0
    %854 = vmatpush1.msra.mxu0 0.0
    %855 = vmatprep.mubr.f32.mxu0 0.0
    %v856 = vand.u32 %v585, 4294901760
    %857 = vmatmul.mubr.f32.gmra.mrb[0].mxu0 %v856
    %v858 = vpop.f32.mrb[0].mxu0
    %v859 = vadd.f32 %v698, %v858
    %v860 = vpop.f32.mrb[0].mxu0
    %861 = vmatprep.mubr.f32.mxu0 0.0
    %v862 = vand.u32 %v586, 4294901760
    %863 = vmatmul.mubr.f32.gmra.mrb[0].mxu0 %v862
    %v864 = vpop.f32.mrb[0].mxu0
    %v865 = vadd.f32 %v708, %v864
    %v866 = vpop.f32.mrb[0].mxu0
    %867 = vdwg.mxu0
    %868 = vmatprep.subr.mxu0 0.0
    %v869 = vand.u32 %v587, 4294901760
    %v870 = vsub.f32 %v587, %v869
    %871 = vmatpush1.msra.mxu0 %v870
    %872 = vmatprep.subr.mxu0 0.0
    %v873 = vand.u32 %v588, 4294901760
    %v874 = vsub.f32 %v588, %v873
    %875 = vmatpush1.msra.mxu0 %v874
    %876 = vmatprep.subr.mxu0 0.0
    %v877 = vand.u32 %v589, 4294901760
    %v878 = vsub.f32 %v589, %v877
    %879 = vmatpush1.msra.mxu0 %v878
    %880 = vmatprep.subr.mxu0 0.0
    %v881 = vand.u32 %v590, 4294901760
    %v882 = vsub.f32 %v590, %v881
    %883 = vmatpush1.msra.mxu0 %v882
    %884 = vmatprep.subr.mxu0 0.0
    %v885 = vand.u32 %v591, 4294901760
    %v886 = vsub.f32 %v591, %v885
    %887 = vmatpush1.msra.mxu0 %v886
    %888 = vmatprep.subr.mxu0 0.0
    %v889 = vand.u32 %v592, 4294901760
    %v890 = vsub.f32 %v592, %v889
    %891 = vmatpush1.msra.mxu0 %v890
    %892 = vmatprep.subr.mxu0 0.0
    %v893 = vand.u32 %v593, 4294901760
    %v894 = vsub.f32 %v593, %v893
    %895 = vmatpush1.msra.mxu0 %v894
    %896 = vmatprep.subr.mxu0 0.0
    %v897 = vand.u32 %v594, 4294901760
    %v898 = vsub.f32 %v594, %v897
    %899 = vmatpush1.msra.mxu0 %v898
    %900 = vmatprep.subr.mxu0 0.0
    %v901 = vand.u32 %v595, 4294901760
    %v902 = vsub.f32 %v595, %v901
    %903 = vmatpush1.msra.mxu0 %v902
    %904 = vmatprep.subr.mxu0 0.0
    %v905 = vand.u32 %v596, 4294901760
    %v906 = vsub.f32 %v596, %v905
    %907 = vmatpush1.msra.mxu0 %v906
    %908 = vmatprep.subr.mxu0 0.0
    %v909 = vand.u32 %v597, 4294901760
    %v910 = vsub.f32 %v597, %v909
    %911 = vmatpush1.msra.mxu0 %v910
    %912 = vmatprep.subr.mxu0 0.0
    %v913 = vand.u32 %v598, 4294901760
    %v914 = vsub.f32 %v598, %v913
    %915 = vmatpush1.msra.mxu0 %v914
    %916 = vmatprep.subr.mxu0 0.0
    %v917 = vand.u32 %v599, 4294901760
    %v918 = vsub.f32 %v599, %v917
    %919 = vmatpush1.msra.mxu0 %v918
    %920 = vmatprep.subr.mxu0 0.0
    %v921 = vand.u32 %v600, 4294901760
    %v922 = vsub.f32 %v600, %v921
    %923 = vmatpush1.msra.mxu0 %v922
    %924 = vmatprep.subr.mxu0 0.0
    %v925 = vand.u32 %v601, 4294901760
    %v926 = vsub.f32 %v601, %v925
    %927 = vmatpush1.msra.mxu0 %v926
    %928 = vmatprep.subr.mxu0 0.0
    %v929 = vand.u32 %v602, 4294901760
    %v930 = vsub.f32 %v602, %v929
    %931 = vmatpush1.msra.mxu0 %v930
    %932 = vmatprep.subr.mxu0 0.0
    %933 = vmatpush1.msra.mxu0 0.0
    %934 = vmatprep.subr.mxu0 0.0
    %935 = vmatpush1.msra.mxu0 0.0
    %936 = vmatprep.subr.mxu0 0.0
    %937 = vmatpush1.msra.mxu0 0.0
    %938 = vmatprep.subr.mxu0 0.0
    %939 = vmatpush1.msra.mxu0 0.0
    %940 = vmatprep.subr.mxu0 0.0
    %941 = vmatpush1.msra.mxu0 0.0
    %942 = vmatprep.subr.mxu0 0.0
    %943 = vmatpush1.msra.mxu0 0.0
    %944 = vmatprep.subr.mxu0 0.0
    %945 = vmatpush1.msra.mxu0 0.0
    %946 = vmatprep.subr.mxu0 0.0
    %947 = vmatpush1.msra.mxu0 0.0
    %948 = vmatprep.subr.mxu0 0.0
    %949 = vmatpush1.msra.mxu0 0.0
    %950 = vmatprep.subr.mxu0 0.0
    %951 = vmatpush1.msra.mxu0 0.0
    %952 = vmatprep.subr.mxu0 0.0
    %953 = vmatpush1.msra.mxu0 0.0
    %954 = vmatprep.subr.mxu0 0.0
    %955 = vmatpush1.msra.mxu0 0.0
    %956 = vmatprep.subr.mxu0 0.0
    %957 = vmatpush1.msra.mxu0 0.0
    %958 = vmatprep.subr.mxu0 0.0
    %959 = vmatpush1.msra.mxu0 0.0
    %960 = vmatprep.subr.mxu0 0.0
    %961 = vmatpush1.msra.mxu0 0.0
    %962 = vmatprep.subr.mxu0 0.0
    %963 = vmatpush1.msra.mxu0 0.0
    %964 = vmatprep.mubr.f32.mxu0 0.0
    %v965 = vand.u32 %v585, 4294901760
    %v966 = vsub.f32 %v585, %v965
    %967 = vmatmul.mubr.f32.gmra.mrb[0].mxu0 %v966
    %v968 = vpop.f32.mrb[0].mxu0
    %v969 = vadd.f32 %v859, %v968
    %v970 = vpop.f32.mrb[0].mxu0
    %971 = vmatprep.mubr.f32.mxu0 0.0
    %v972 = vand.u32 %v586, 4294901760
    %v973 = vsub.f32 %v586, %v972
    %974 = vmatmul.mubr.f32.gmra.mrb[0].mxu0 %v973
    %v975 = vpop.f32.mrb[0].mxu0
    %v976 = vadd.f32 %v865, %v975
    %v977 = vpop.f32.mrb[0].mxu0
    %978 = vdwg.mxu0
    %979 = vmatprep.subr.mxu0 0.0
    %v980 = vand.u32 %v587, 4294901760
    %981 = vmatpush1.msra.mxu0 %v980
    %982 = vmatprep.subr.mxu0 0.0
    %v983 = vand.u32 %v588, 4294901760
    %984 = vmatpush1.msra.mxu0 %v983
    %985 = vmatprep.subr.mxu0 0.0
    %v986 = vand.u32 %v589, 4294901760
    %987 = vmatpush1.msra.mxu0 %v986
    %988 = vmatprep.subr.mxu0 0.0
    %v989 = vand.u32 %v590, 4294901760
    %990 = vmatpush1.msra.mxu0 %v989
    %991 = vmatprep.subr.mxu0 0.0
    %v992 = vand.u32 %v591, 4294901760
    %993 = vmatpush1.msra.mxu0 %v992
    %994 = vmatprep.subr.mxu0 0.0
    %v995 = vand.u32 %v592, 4294901760
    %996 = vmatpush1.msra.mxu0 %v995
    %997 = vmatprep.subr.mxu0 0.0
    %v998 = vand.u32 %v593, 4294901760
    %999 = vmatpush1.msra.mxu0 %v998
    %1000 = vmatprep.subr.mxu0 0.0
    %v1001 = vand.u32 %v594, 4294901760
    %1002 = vmatpush1.msra.mxu0 %v1001
    %1003 = vmatprep.subr.mxu0 0.0
    %v1004 = vand.u32 %v595, 4294901760
    %1005 = vmatpush1.msra.mxu0 %v1004
    %1006 = vmatprep.subr.mxu0 0.0
    %v1007 = vand.u32 %v596, 4294901760
    %1008 = vmatpush1.msra.mxu0 %v1007
    %1009 = vmatprep.subr.mxu0 0.0
    %v1010 = vand.u32 %v597, 4294901760
    %1011 = vmatpush1.msra.mxu0 %v1010
    %1012 = vmatprep.subr.mxu0 0.0
    %v1013 = vand.u32 %v598, 4294901760
    %1014 = vmatpush1.msra.mxu0 %v1013
    %1015 = vmatprep.subr.mxu0 0.0
    %v1016 = vand.u32 %v599, 4294901760
    %1017 = vmatpush1.msra.mxu0 %v1016
    %1018 = vmatprep.subr.mxu0 0.0
    %v1019 = vand.u32 %v600, 4294901760
    %1020 = vmatpush1.msra.mxu0 %v1019
    %1021 = vmatprep.subr.mxu0 0.0
    %v1022 = vand.u32 %v601, 4294901760
    %1023 = vmatpush1.msra.mxu0 %v1022
    %1024 = vmatprep.subr.mxu0 0.0
    %v1025 = vand.u32 %v602, 4294901760
    %1026 = vmatpush1.msra.mxu0 %v1025
    %1027 = vmatprep.subr.mxu0 0.0
    %1028 = vmatpush1.msra.mxu0 0.0
    %1029 = vmatprep.subr.mxu0 0.0
    %1030 = vmatpush1.msra.mxu0 0.0
    %1031 = vmatprep.subr.mxu0 0.0
    %1032 = vmatpush1.msra.mxu0 0.0
    %1033 = vmatprep.subr.mxu0 0.0
    %1034 = vmatpush1.msra.mxu0 0.0
    %1035 = vmatprep.subr.mxu0 0.0
    %1036 = vmatpush1.msra.mxu0 0.0
    %1037 = vmatprep.subr.mxu0 0.0
    %1038 = vmatpush1.msra.mxu0 0.0
    %1039 = vmatprep.subr.mxu0 0.0
    %1040 = vmatpush1.msra.mxu0 0.0
    %1041 = vmatprep.subr.mxu0 0.0
    %1042 = vmatpush1.msra.mxu0 0.0
    %1043 = vmatprep.subr.mxu0 0.0
    %1044 = vmatpush1.msra.mxu0 0.0
    %1045 = vmatprep.subr.mxu0 0.0
    %1046 = vmatpush1.msra.mxu0 0.0
    %1047 = vmatprep.subr.mxu0 0.0
    %1048 = vmatpush1.msra.mxu0 0.0
    %1049 = vmatprep.subr.mxu0 0.0
    %1050 = vmatpush1.msra.mxu0 0.0
    %1051 = vmatprep.subr.mxu0 0.0
    %1052 = vmatpush1.msra.mxu0 0.0
    %1053 = vmatprep.subr.mxu0 0.0
    %1054 = vmatpush1.msra.mxu0 0.0
    %1055 = vmatprep.subr.mxu0 0.0
    %1056 = vmatpush1.msra.mxu0 0.0
    %1057 = vmatprep.subr.mxu0 0.0
    %1058 = vmatpush1.msra.mxu0 0.0
    %1059 = vmatprep.mubr.f32.mxu0 0.0
    %v1060 = vand.u32 %v585, 4294901760
    %v1061 = vsub.f32 %v585, %v1060
    %v1062 = vand.u32 %v1061, 4294901760
    %1063 = vmatmul.mubr.f32.gmra.mrb[0].mxu0 %v1062
    %v1064 = vpop.f32.mrb[0].mxu0
    %v1065 = vadd.f32 %v969, %v1064
    %v1066 = vpop.f32.mrb[0].mxu0
    %1067 = vmatprep.mubr.f32.mxu0 0.0
    %v1068 = vand.u32 %v586, 4294901760
    %v1069 = vsub.f32 %v586, %v1068
    %v1070 = vand.u32 %v1069, 4294901760
    %1071 = vmatmul.mubr.f32.gmra.mrb[0].mxu0 %v1070
    %v1072 = vpop.f32.mrb[0].mxu0
    %v1073 = vadd.f32 %v976, %v1072
    %v1074 = vpop.f32.mrb[0].mxu0
    %1075 = vdwg.mxu0
    %1076 = vmatprep.subr.mxu0 0.0
    %v1077 = vand.u32 %v587, 4294901760
    %v1078 = vsub.f32 %v587, %v1077
    %v1079 = vand.u32 %v1078, 4294901760
    %1080 = vmatpush1.msra.mxu0 %v1079
    %1081 = vmatprep.subr.mxu0 0.0
    %v1082 = vand.u32 %v588, 4294901760
    %v1083 = vsub.f32 %v588, %v1082
    %v1084 = vand.u32 %v1083, 4294901760
    %1085 = vmatpush1.msra.mxu0 %v1084
    %1086 = vmatprep.subr.mxu0 0.0
    %v1087 = vand.u32 %v589, 4294901760
    %v1088 = vsub.f32 %v589, %v1087
    %v1089 = vand.u32 %v1088, 4294901760
    %1090 = vmatpush1.msra.mxu0 %v1089
    %1091 = vmatprep.subr.mxu0 0.0
    %v1092 = vand.u32 %v590, 4294901760
    %v1093 = vsub.f32 %v590, %v1092
    %v1094 = vand.u32 %v1093, 4294901760
    %1095 = vmatpush1.msra.mxu0 %v1094
    %1096 = vmatprep.subr.mxu0 0.0
    %v1097 = vand.u32 %v591, 4294901760
    %v1098 = vsub.f32 %v591, %v1097
    %v1099 = vand.u32 %v1098, 4294901760
    %1100 = vmatpush1.msra.mxu0 %v1099
    %1101 = vmatprep.subr.mxu0 0.0
    %v1102 = vand.u32 %v592, 4294901760
    %v1103 = vsub.f32 %v592, %v1102
    %v1104 = vand.u32 %v1103, 4294901760
    %1105 = vmatpush1.msra.mxu0 %v1104
    %1106 = vmatprep.subr.mxu0 0.0
    %v1107 = vand.u32 %v593, 4294901760
    %v1108 = vsub.f32 %v593, %v1107
    %v1109 = vand.u32 %v1108, 4294901760
    %1110 = vmatpush1.msra.mxu0 %v1109
    %1111 = vmatprep.subr.mxu0 0.0
    %v1112 = vand.u32 %v594, 4294901760
    %v1113 = vsub.f32 %v594, %v1112
    %v1114 = vand.u32 %v1113, 4294901760
    %1115 = vmatpush1.msra.mxu0 %v1114
    %1116 = vmatprep.subr.mxu0 0.0
    %v1117 = vand.u32 %v595, 4294901760
    %v1118 = vsub.f32 %v595, %v1117
    %v1119 = vand.u32 %v1118, 4294901760
    %1120 = vmatpush1.msra.mxu0 %v1119
    %1121 = vmatprep.subr.mxu0 0.0
    %v1122 = vand.u32 %v596, 4294901760
    %v1123 = vsub.f32 %v596, %v1122
    %v1124 = vand.u32 %v1123, 4294901760
    %1125 = vmatpush1.msra.mxu0 %v1124
    %1126 = vmatprep.subr.mxu0 0.0
    %v1127 = vand.u32 %v597, 4294901760
    %v1128 = vsub.f32 %v597, %v1127
    %v1129 = vand.u32 %v1128, 4294901760
    %1130 = vmatpush1.msra.mxu0 %v1129
    %1131 = vmatprep.subr.mxu0 0.0
    %v1132 = vand.u32 %v598, 4294901760
    %v1133 = vsub.f32 %v598, %v1132
    %v1134 = vand.u32 %v1133, 4294901760
    %1135 = vmatpush1.msra.mxu0 %v1134
    %1136 = vmatprep.subr.mxu0 0.0
    %v1137 = vand.u32 %v599, 4294901760
    %v1138 = vsub.f32 %v599, %v1137
    %v1139 = vand.u32 %v1138, 4294901760
    %1140 = vmatpush1.msra.mxu0 %v1139
    %1141 = vmatprep.subr.mxu0 0.0
    %v1142 = vand.u32 %v600, 4294901760
    %v1143 = vsub.f32 %v600, %v1142
    %v1144 = vand.u32 %v1143, 4294901760
    %1145 = vmatpush1.msra.mxu0 %v1144
    %1146 = vmatprep.subr.mxu0 0.0
    %v1147 = vand.u32 %v601, 4294901760
    %v1148 = vsub.f32 %v601, %v1147
    %v1149 = vand.u32 %v1148, 4294901760
    %1150 = vmatpush1.msra.mxu0 %v1149
    %1151 = vmatprep.subr.mxu0 0.0
    %v1152 = vand.u32 %v602, 4294901760
    %v1153 = vsub.f32 %v602, %v1152
    %v1154 = vand.u32 %v1153, 4294901760
    %1155 = vmatpush1.msra.mxu0 %v1154
    %1156 = vmatprep.subr.mxu0 0.0
    %1157 = vmatpush1.msra.mxu0 0.0
    %1158 = vmatprep.subr.mxu0 0.0
    %1159 = vmatpush1.msra.mxu0 0.0
    %1160 = vmatprep.subr.mxu0 0.0
    %1161 = vmatpush1.msra.mxu0 0.0
    %1162 = vmatprep.subr.mxu0 0.0
    %1163 = vmatpush1.msra.mxu0 0.0
    %1164 = vmatprep.subr.mxu0 0.0
    %1165 = vmatpush1.msra.mxu0 0.0
    %1166 = vmatprep.subr.mxu0 0.0
    %1167 = vmatpush1.msra.mxu0 0.0
    %1168 = vmatprep.subr.mxu0 0.0
    %1169 = vmatpush1.msra.mxu0 0.0
    %1170 = vmatprep.subr.mxu0 0.0
    %1171 = vmatpush1.msra.mxu0 0.0
    %1172 = vmatprep.subr.mxu0 0.0
    %1173 = vmatpush1.msra.mxu0 0.0
    %1174 = vmatprep.subr.mxu0 0.0
    %1175 = vmatpush1.msra.mxu0 0.0
    %1176 = vmatprep.subr.mxu0 0.0
    %1177 = vmatpush1.msra.mxu0 0.0
    %1178 = vmatprep.subr.mxu0 0.0
    %1179 = vmatpush1.msra.mxu0 0.0
    %1180 = vmatprep.subr.mxu0 0.0
    %1181 = vmatpush1.msra.mxu0 0.0
    %1182 = vmatprep.subr.mxu0 0.0
    %1183 = vmatpush1.msra.mxu0 0.0
    %1184 = vmatprep.subr.mxu0 0.0
    %1185 = vmatpush1.msra.mxu0 0.0
    %1186 = vmatprep.subr.mxu0 0.0
    %1187 = vmatpush1.msra.mxu0 0.0
    %1188 = vmatprep.mubr.f32.mxu0 0.0
    %v1189 = vand.u32 %v585, 4294901760
    %1190 = vmatmul.mubr.f32.gmra.mrb[0].mxu0 %v1189
    %v1191 = vpop.f32.mrb[0].mxu0
    %v1192 = vadd.f32 %v1065, %v1191
    %v1193 = vpop.f32.mrb[0].mxu0
    %1194 = vmatprep.mubr.f32.mxu0 0.0
    %v1195 = vand.u32 %v586, 4294901760
    %1196 = vmatmul.mubr.f32.gmra.mrb[0].mxu0 %v1195
    %v1197 = vpop.f32.mrb[0].mxu0
    %v1198 = vadd.f32 %v1073, %v1197
    %v1199 = vpop.f32.mrb[0].mxu0
    %1200 = vdwg.mxu0
    %1201 = vmatprep.subr.mxu0 0.0
    %v1202 = vand.u32 %v587, 4294901760
    %1203 = vmatpush1.msra.mxu0 %v1202
    %1204 = vmatprep.subr.mxu0 0.0
    %v1205 = vand.u32 %v588, 4294901760
    %1206 = vmatpush1.msra.mxu0 %v1205
    %1207 = vmatprep.subr.mxu0 0.0
    %v1208 = vand.u32 %v589, 4294901760
    %1209 = vmatpush1.msra.mxu0 %v1208
    %1210 = vmatprep.subr.mxu0 0.0
    %v1211 = vand.u32 %v590, 4294901760
    %1212 = vmatpush1.msra.mxu0 %v1211
    %1213 = vmatprep.subr.mxu0 0.0
    %v1214 = vand.u32 %v591, 4294901760
    %1215 = vmatpush1.msra.mxu0 %v1214
    %1216 = vmatprep.subr.mxu0 0.0
    %v1217 = vand.u32 %v592, 4294901760
    %1218 = vmatpush1.msra.mxu0 %v1217
    %1219 = vmatprep.subr.mxu0 0.0
    %v1220 = vand.u32 %v593, 4294901760
    %1221 = vmatpush1.msra.mxu0 %v1220
    %1222 = vmatprep.subr.mxu0 0.0
    %v1223 = vand.u32 %v594, 4294901760
    %1224 = vmatpush1.msra.mxu0 %v1223
    %1225 = vmatprep.subr.mxu0 0.0
    %v1226 = vand.u32 %v595, 4294901760
    %1227 = vmatpush1.msra.mxu0 %v1226
    %1228 = vmatprep.subr.mxu0 0.0
    %v1229 = vand.u32 %v596, 4294901760
    %1230 = vmatpush1.msra.mxu0 %v1229
    %1231 = vmatprep.subr.mxu0 0.0
    %v1232 = vand.u32 %v597, 4294901760
    %1233 = vmatpush1.msra.mxu0 %v1232
    %1234 = vmatprep.subr.mxu0 0.0
    %v1235 = vand.u32 %v598, 4294901760
    %1236 = vmatpush1.msra.mxu0 %v1235
    %1237 = vmatprep.subr.mxu0 0.0
    %v1238 = vand.u32 %v599, 4294901760
    %1239 = vmatpush1.msra.mxu0 %v1238
    %1240 = vmatprep.subr.mxu0 0.0
    %v1241 = vand.u32 %v600, 4294901760
    %1242 = vmatpush1.msra.mxu0 %v1241
    %1243 = vmatprep.subr.mxu0 0.0
    %v1244 = vand.u32 %v601, 4294901760
    %1245 = vmatpush1.msra.mxu0 %v1244
    %1246 = vmatprep.subr.mxu0 0.0
    %v1247 = vand.u32 %v602, 4294901760
    %1248 = vmatpush1.msra.mxu0 %v1247
    %1249 = vmatprep.subr.mxu0 0.0
    %1250 = vmatpush1.msra.mxu0 0.0
    %1251 = vmatprep.subr.mxu0 0.0
    %1252 = vmatpush1.msra.mxu0 0.0
    %1253 = vmatprep.subr.mxu0 0.0
    %1254 = vmatpush1.msra.mxu0 0.0
    %1255 = vmatprep.subr.mxu0 0.0
    %1256 = vmatpush1.msra.mxu0 0.0
    %1257 = vmatprep.subr.mxu0 0.0
    %1258 = vmatpush1.msra.mxu0 0.0
    %1259 = vmatprep.subr.mxu0 0.0
    %1260 = vmatpush1.msra.mxu0 0.0
    %1261 = vmatprep.subr.mxu0 0.0
    %1262 = vmatpush1.msra.mxu0 0.0
    %1263 = vmatprep.subr.mxu0 0.0
    %1264 = vmatpush1.msra.mxu0 0.0
    %1265 = vmatprep.subr.mxu0 0.0
    %1266 = vmatpush1.msra.mxu0 0.0
    %1267 = vmatprep.subr.mxu0 0.0
    %1268 = vmatpush1.msra.mxu0 0.0
    %1269 = vmatprep.subr.mxu0 0.0
    %1270 = vmatpush1.msra.mxu0 0.0
    %1271 = vmatprep.subr.mxu0 0.0
    %1272 = vmatpush1.msra.mxu0 0.0
    %1273 = vmatprep.subr.mxu0 0.0
    %1274 = vmatpush1.msra.mxu0 0.0
    %1275 = vmatprep.subr.mxu0 0.0
    %1276 = vmatpush1.msra.mxu0 0.0
    %1277 = vmatprep.subr.mxu0 0.0
    %1278 = vmatpush1.msra.mxu0 0.0
    %1279 = vmatprep.subr.mxu0 0.0
    %1280 = vmatpush1.msra.mxu0 0.0
    %1281 = vmatprep.mubr.f32.mxu0 0.0
    %v1282 = vand.u32 %v585, 4294901760
    %1283 = vmatmul.mubr.f32.gmra.mrb[0].mxu0 %v1282
    %v1284 = vpop.f32.mrb[0].mxu0
    %v1285 = vadd.f32 %v1192, %v1284
    %v1286 = vpop.f32.mrb[0].mxu0
    %1287 = vmatprep.mubr.f32.mxu0 0.0
    %v1288 = vand.u32 %v586, 4294901760
    %1289 = vmatmul.mubr.f32.gmra.mrb[0].mxu0 %v1288
    %v1290 = vpop.f32.mrb[0].mxu0
    %v1291 = vadd.f32 %v1198, %v1290
    %v1292 = vpop.f32.mrb[0].mxu0
    %1293 = vdwg.mxu0
    %1294 = vst.msk [vmem:[#allocation2] sm:$0xff] %vm34, %v1285
    %1295 = vst.msk [vmem:[#allocation2 + $0x8] sm:$0xff] %vm34, %v1291
    // Predicated region
    $region22: #{tpu_custom_call.1} parent=1 // pred_check
      _
    $region23: #{tpu_custom_call.1} parent=1 // pred_check_branch
      %1297 = sbr.rel (0) target = $region25
    $region24: #{tpu_custom_call.1} parent=1 // pred_region
      %s1299 = ssub.s32 256, 256
      %1300 = vsyncadd [#allocation3], %s1299
      %s1301 = sshll.u32 [#allocation2], 4
      %s1302 = int_to_ptr.vmem [resolvable:$true] %s1301
      %1307 = dma.vmem_to_hbm [thread:$0]  %s1302, 256, %s5, [#allocation3], 128, 128, 8
    $region25: #{tpu_custom_call.1} parent=1 // pred_fallthru
      _
    // Predicated region
    $region26: #{tpu_custom_call.1} parent=1 // pred_check
      _
    $region27: #{tpu_custom_call.1} parent=1 // pred_check_branch
      %1309 = sbr.rel (0) target = $region29
    $region28: #{tpu_custom_call.1} parent=1 // pred_region
      %1310 = dma.done [#allocation3], 256
    $region29: #{tpu_custom_call.1} parent=1 // pred_fallthru
      _
    %1311 = vsyncpa [#allocation3], 1

</llo_original>
